<compile_context>
chip_gen: v6e
topology: v6e:2x2x1
jax: 0.10.0
libtpu: 0.0.40
codegen_flags: <defaults>
</compile_context>

<pallas_src>
import functools
import numpy as np
import jax
import jax.numpy as jnp
from jax.experimental import pallas as pl
from jax.experimental.pallas import tpu as pltpu

MIN_NORM = 1e-15          # geoopt MIN_NORM
BALL_EPS_F32 = 4e-3       # geoopt BALL_EPS[torch.float32]


def _round_up(x, m):
    return ((x + m - 1) // m) * m


def _poincare_plane_kernel(x_ref, w_ref, p2_ref, pa_ref, an_ref, out_ref,
                           *, c, signed, scaled, p_pad):
    """One (TN, Ppad) output tile of signed plane distances for one sub-space.

    x_ref  : (TN, D)      euclidean inputs for this space / batch tile
    w_ref  : (D, 2*Ppad)  fused weight, columns = [bias p | normals a]
    p2_ref : (1, Ppad)    ||p||^2   (hoisted, grid-invariant)
    pa_ref : (1, Ppad)    <p, a>    (hoisted)
    an_ref : (1, Ppad)    ||a||     (hoisted)
    out_ref: (TN, Ppad)   distances accumulated over spaces
    """
    s = pl.program_id(1)
    sqrt_c = c ** 0.5
    inv_sqrt_c = 1.0 / sqrt_c
    k = -c

    x = x_ref[...]                         # (TN, D) f32
    p2 = p2_ref[...]                       # (1, Ppad)
    pa = pa_ref[...]                       # (1, Ppad)
    a_norm = an_ref[...]                   # (1, Ppad)

    # ---- expmap0 (euclidean -> ball) + projection, ||gamma|| analytically ----
    u_norm = jnp.maximum(jnp.sqrt(jnp.sum(x * x, axis=-1, keepdims=True)), MIN_NORM)
    tanh_u = jnp.tanh(sqrt_c * u_norm)
    gamma = x * (tanh_u / (sqrt_c * u_norm))                 # (TN, D)
    g_norm = jnp.maximum(tanh_u * inv_sqrt_c, MIN_NORM)      # == ||gamma||, no 2nd reduce
    maxnorm = (1.0 - BALL_EPS_F32) * inv_sqrt_c
    scale = jnp.minimum(maxnorm / g_norm, 1.0)
    xb = gamma * scale                                       # point on the ball
    xn = jnp.minimum(g_norm, maxnorm)
    x2 = xn * xn                                             # (TN, 1) == ||xb||^2

    # ---- single fused MXU pass: (TN, 2*Ppad) = [ <x, p_j> | <x, a_j> ] ----
    xw = jnp.dot(xb, w_ref[...], preferred_element_type=jnp.float32)
    XP = xw[:, :p_pad]
    XA = xw[:, p_pad:]

    # ---- diff = mobius_add(-p, x) expanded analytically (no (TN, P, D) temp) ----
    xy = -XP                                                 # <-p, x>
    alpha = 1.0 - 2.0 * k * xy - k * x2                      # (TN, Ppad)
    beta = 1.0 + k * p2                                      # (1, Ppad)
    inv_dm = 1.0 / jnp.maximum(1.0 - 2.0 * k * xy + (k * k) * p2 * x2, MIN_NORM)
    diff_sq = alpha * alpha * p2 - 2.0 * alpha * beta * XP + beta * beta * x2
    diff_norm2 = jnp.maximum(diff_sq * (inv_dm * inv_dm), MIN_NORM)
    sc_diff_a = (beta * XA - alpha * pa) * inv_dm
    if not signed:
        sc_diff_a = jnp.abs(sc_diff_a)

    num = 2.0 * sc_diff_a
    den_raw = (1.0 + k * diff_norm2) * a_norm
    den = jnp.where(den_raw >= 0.0, 1.0, -1.0) * jnp.maximum(jnp.abs(den_raw), MIN_NORM)

    # arsin_k for k = -c < 0: arcsinh(z)/sqrt(c), sign-stable formulation
    z = (num / den) * sqrt_c
    zabs = jnp.abs(z)
    asinh = jnp.where(z >= 0.0, 1.0, -1.0) * jnp.log(zabs + jnp.sqrt(zabs * zabs + 1.0))
    dist = asinh * inv_sqrt_c
    if scaled:
        dist = dist * a_norm

    @pl.when(s == 0)
    def _():
        out_ref[...] = dist                                  # pure store (no zero-init pass)

    @pl.when(s > 0)
    def _():
        out_ref[...] = out_ref[...] + dist                   # accumulate over spaces


def poincare_plane_distance(x, normals, bias, *, c=1.0, signed=True, scaled=True,
                            logits_multiplier=1.0, max_tile_n=512):
    """x: (*batch, in_features); normals/bias: (num_planes, num_spaces, dps)."""
    *batch_dims, in_features = x.shape
    P, S, D = normals.shape
    assert in_features == S * D
    N = int(np.prod(batch_dims)) if batch_dims else 1

    Ppad = _round_up(P, 128)                                 # lane-dense output / matmul slices

    # pick the biggest batch tile that keeps the per-step VMEM footprint bounded
    def _vmem_estimate(tn):
        io = 2 * 4 * (tn * D + D * 2 * Ppad + 3 * Ppad + tn * Ppad)   # double-buffered blocks
        temps = 8 * 4 * tn * Ppad                                     # live (TN, Ppad) f32 temps
        return io + temps

    TN = min(max_tile_n, _round_up(N, 8))
    while TN > 8 and _vmem_estimate(TN) > 12 * 1024 * 1024:
        TN = max(8, 8 * (TN // 16))
    Npad = _round_up(N, TN)

    xf = x.reshape(N, in_features).astype(jnp.float32)
    if Npad != N:
        xf = jnp.pad(xf, ((0, Npad - N), (0, 0)))
    if S == 1:
        x_s = xf.reshape(1, Npad, D)                         # no transpose for the default case
    else:
        x_s = xf.reshape(Npad, S, D).transpose(1, 0, 2)      # (S, Npad, D), once, outside hot path

    a = jnp.transpose(normals.astype(jnp.float32), (1, 0, 2))    # (S, P, D)
    p = jnp.transpose(bias.astype(jnp.float32), (1, 0, 2))       # (S, P, D)
    if Ppad != P:
        pad = ((0, 0), (0, Ppad - P), (0, 0))
        a = jnp.pad(a, pad)
        p = jnp.pad(p, pad)

    # hoisted per-plane scalars (grid-invariant)
    p2 = jnp.sum(p * p, axis=-1)[:, None, :]                 # (S, 1, Ppad)
    pa = jnp.sum(p * a, axis=-1)[:, None, :]                 # (S, 1, Ppad)
    an = jnp.sqrt(jnp.sum(a * a, axis=-1))[:, None, :]       # (S, 1, Ppad)

    # fused MXU weight: (S, D, 2*Ppad), columns = [p | a]
    w = jnp.transpose(jnp.concatenate([p, a], axis=1), (0, 2, 1))

    kernel = functools.partial(_poincare_plane_kernel, c=float(c), signed=signed,
                               scaled=scaled, p_pad=Ppad)
    out = pl.pallas_call(
        kernel,
        out_shape=jax.ShapeDtypeStruct((Npad, Ppad), jnp.float32),
        grid_spec=pltpu.PrefetchScalarGridSpec(
            num_scalar_prefetch=0,
            grid=(Npad // TN, S),
            in_specs=[
                pl.BlockSpec((None, TN, D), lambda n, s: (s, n, 0)),
                pl.BlockSpec((None, D, 2 * Ppad), lambda n, s: (s, 0, 0)),
                pl.BlockSpec((None, 1, Ppad), lambda n, s: (s, 0, 0)),
                pl.BlockSpec((None, 1, Ppad), lambda n, s: (s, 0, 0)),
                pl.BlockSpec((None, 1, Ppad), lambda n, s: (s, 0, 0)),
            ],
            out_specs=pl.BlockSpec((TN, Ppad), lambda n, s: (n, 0)),
        ),
        compiler_params=pltpu.CompilerParams(
            dimension_semantics=("parallel", "arbitrary"),
            vmem_limit_bytes=48 * 1024 * 1024,               # headroom on v7x's 64 MiB VMEM
        ),
    )(x_s, w, p2, pa, an)

    out = out[:N, :P] * logits_multiplier
    return out.reshape(*batch_dims, P)


def _reference(x, normals, bias, c=1.0):
    """Pure numpy re-implementation of the PyTorch/geoopt forward (for checking)."""
    x = np.asarray(x, np.float64)
    normals = np.asarray(normals, np.float64)
    bias = np.asarray(bias, np.float64)
    *bd, F = x.shape
    P, S, D = normals.shape
    xv = x.reshape(-1, S, D)
    sqrt_c = np.sqrt(c)
    k = -c
    un = np.maximum(np.linalg.norm(xv, axis=-1, keepdims=True), MIN_NORM)
    g = np.tanh(sqrt_c * un) * xv / (sqrt_c * un)
    mn = (1.0 - BALL_EPS_F32) / sqrt_c
    gn = np.maximum(np.linalg.norm(g, axis=-1, keepdims=True), MIN_NORM)
    xb = np.where(gn > mn, g / gn * mn, g)                   # (N, S, D)
    xp = xb[:, None, :, :]                                   # (N, 1, S, D)
    p = bias[None]                                           # (1, P, S, D)
    a = normals[None]
    mx = -p
    x2 = (mx ** 2).sum(-1, keepdims=True)
    y2 = (xp ** 2).sum(-1, keepdims=True)
    xy = (mx * xp).sum(-1, keepdims=True)
    num = (1 - 2 * k * xy - k * y2) * mx + (1 + k * x2) * xp
    den = np.maximum(1 - 2 * k * xy + k * k * x2 * y2, MIN_NORM)
    diff = num / den
    dn2 = np.maximum((diff ** 2).sum(-1), MIN_NORM)
    sda = (diff * a).sum(-1)
    an = np.linalg.norm(a, axis=-1)
    dr = (1 + k * dn2) * an
    de = np.where(dr >= 0, 1.0, -1.0) * np.maximum(np.abs(dr), MIN_NORM)
    z = (2.0 * sda / de) * sqrt_c
    dist = np.arcsinh(z) / sqrt_c * an
    return dist.sum(-1).reshape(*bd, P)


if __name__ == "__main__":
    key = jax.random.PRNGKey(0)

    def run_case(case_key, batch_dims, in_features, num_planes, dps, nonzero_bias):
        num_spaces = in_features // dps
        kx, kn, kb = jax.random.split(case_key, 3)
        x = jax.random.normal(kx, (*batch_dims, in_features), dtype=jnp.float32)
        # reset_parameters(): normals ~ N(0, 1/sqrt(in_features)), bias <- zeros
        normals = jax.random.normal(kn, (num_planes, num_spaces, dps),
                                    dtype=jnp.float32) / np.sqrt(in_features)
        if nonzero_bias:
            bias = 0.1 * jax.random.normal(kb, (num_planes, num_spaces, dps),
                                           dtype=jnp.float32) / np.sqrt(dps)
        else:
            bias = jnp.zeros((num_planes, num_spaces, dps), dtype=jnp.float32)

        out = poincare_plane_distance(x, normals, bias, c=1.0, signed=True,
                                      scaled=True, logits_multiplier=1.0)
        out = jax.block_until_ready(out)
        assert out.shape == (*batch_dims, num_planes), out.shape
        ref = _reference(np.asarray(x), np.asarray(normals), np.asarray(bias), c=1.0)
        np.testing.assert_allclose(np.asarray(out), ref, rtol=2e-4, atol=2e-4)

    k1, k2, k3 = jax.random.split(key, 3)
    # 1) module defaults: one hyperbolic space, zero-initialized bias
    run_case(k1, (2, 8), 32, 128, 32, nonzero_bias=False)
    # 2) exercises plane padding (96 -> 128), batch padding (18 -> 24), nonzero bias
    run_case(k2, (2, 9), 32, 96, 32, nonzero_bias=True)
    # 3) multiple sub-spaces (dimensions_per_space=16 -> num_spaces=2), accumulation path
    run_case(k3, (3, 5), 32, 64, 16, nonzero_bias=True)

    print("KERNEL_OK")
</pallas_src>

<mosaic_0001>
module attributes {stable_mosaic.version = 11 : i64} {
  func.func @_poincare_plane_kernel(%arg0: i32, %arg1: i32, %arg2: memref<1x16x32xf32, #tpu.memory_space<vmem>>, %arg3: memref<1x32x256xf32, #tpu.memory_space<vmem>>, %arg4: memref<1x1x128xf32, #tpu.memory_space<vmem>>, %arg5: memref<1x1x128xf32, #tpu.memory_space<vmem>>, %arg6: memref<1x1x128xf32, #tpu.memory_space<vmem>>, %arg7: memref<16x128xf32, #tpu.memory_space<vmem>>) attributes {dimension_semantics = [#tpu.dimension_semantics<parallel>, #tpu.dimension_semantics<arbitrary>], iteration_bounds = array<i64: 1, 1>, scalar_prefetch = 0 : i64, scratch_operands = 0 : i64, tpu.core_type = #tpu.core_type<tc>, window_params = [{transform_indices = @transform_0, window_bounds = array<i64: 1, 16, 32>}, {transform_indices = @transform_1, window_bounds = array<i64: 1, 32, 256>}, {transform_indices = @transform_2, window_bounds = array<i64: 1, 1, 128>}, {transform_indices = @transform_3, window_bounds = array<i64: 1, 1, 128>}, {transform_indices = @transform_4, window_bounds = array<i64: 1, 1, 128>}, {transform_indices = @transform_5, window_bounds = array<i64: 16, 128>}]} {
    %c0 = arith.constant 0 : index
    %c0_0 = arith.constant 0 : index
    %c0_1 = arith.constant 0 : index
    %0 = vector.load %arg2[%c0, %c0_0, %c0_1] : memref<1x16x32xf32, #tpu.memory_space<vmem>>, vector<1x16x32xf32>
    %1 = vector.shape_cast %0 : vector<1x16x32xf32> to vector<16x32xf32>
    %c0_2 = arith.constant 0 : index
    %c0_3 = arith.constant 0 : index
    %c0_4 = arith.constant 0 : index
    %2 = vector.load %arg4[%c0_2, %c0_3, %c0_4] : memref<1x1x128xf32, #tpu.memory_space<vmem>>, vector<1x1x128xf32>
    %3 = vector.shape_cast %2 : vector<1x1x128xf32> to vector<1x128xf32>
    %c0_5 = arith.constant 0 : index
    %c0_6 = arith.constant 0 : index
    %c0_7 = arith.constant 0 : index
    %4 = vector.load %arg5[%c0_5, %c0_6, %c0_7] : memref<1x1x128xf32, #tpu.memory_space<vmem>>, vector<1x1x128xf32>
    %5 = vector.shape_cast %4 : vector<1x1x128xf32> to vector<1x128xf32>
    %c0_8 = arith.constant 0 : index
    %c0_9 = arith.constant 0 : index
    %c0_10 = arith.constant 0 : index
    %6 = vector.load %arg6[%c0_8, %c0_9, %c0_10] : memref<1x1x128xf32, #tpu.memory_space<vmem>>, vector<1x1x128xf32>
    %7 = vector.shape_cast %6 : vector<1x1x128xf32> to vector<1x128xf32>
    %8 = arith.mulf %1, %1 : vector<16x32xf32>
    %cst = arith.constant dense<0.000000e+00> : vector<16xf32>
    %9 = vector.multi_reduction <add>, %8, %cst [1] : vector<16x32xf32> to vector<16xf32>
    %10 = vector.shape_cast %9 : vector<16xf32> to vector<16x1xf32>
    %11 = math.sqrt %10 : vector<16x1xf32>
    %cst_11 = arith.constant 1.000000e-15 : f32
    %12 = vector.broadcast %cst_11 : f32 to vector<16x1xf32>
    %13 = arith.maximumf %11, %12 : vector<16x1xf32>
    %cst_12 = arith.constant 1.000000e+00 : f32
    %14 = vector.broadcast %cst_12 : f32 to vector<16x1xf32>
    %15 = arith.mulf %14, %13 : vector<16x1xf32>
    %16 = math.tanh %15 : vector<16x1xf32>
    %cst_13 = arith.constant 1.000000e+00 : f32
    %17 = vector.broadcast %cst_13 : f32 to vector<16x1xf32>
    %18 = arith.mulf %17, %13 : vector<16x1xf32>
    %19 = arith.divf %16, %18 : vector<16x1xf32>
    %20 = vector.broadcast %19 : vector<16x1xf32> to vector<16x32xf32>
    %21 = arith.mulf %1, %20 : vector<16x32xf32>
    %cst_14 = arith.constant 1.000000e+00 : f32
    %22 = vector.broadcast %cst_14 : f32 to vector<16x1xf32>
    %23 = arith.mulf %16, %22 : vector<16x1xf32>
    %cst_15 = arith.constant 1.000000e-15 : f32
    %24 = vector.broadcast %cst_15 : f32 to vector<16x1xf32>
    %25 = arith.maximumf %23, %24 : vector<16x1xf32>
    %cst_16 = arith.constant 0.995999991 : f32
    %26 = vector.broadcast %cst_16 : f32 to vector<16x1xf32>
    %27 = arith.divf %26, %25 : vector<16x1xf32>
    %cst_17 = arith.constant 1.000000e+00 : f32
    %28 = vector.broadcast %cst_17 : f32 to vector<16x1xf32>
    %29 = arith.minimumf %27, %28 : vector<16x1xf32>
    %30 = vector.broadcast %29 : vector<16x1xf32> to vector<16x32xf32>
    %31 = arith.mulf %21, %30 : vector<16x32xf32>
    %cst_18 = arith.constant 0.995999991 : f32
    %32 = vector.broadcast %cst_18 : f32 to vector<16x1xf32>
    %33 = arith.minimumf %25, %32 : vector<16x1xf32>
    %34 = arith.mulf %33, %33 : vector<16x1xf32>
    %c0_19 = arith.constant 0 : index
    %c0_20 = arith.constant 0 : index
    %c0_21 = arith.constant 0 : index
    %35 = vector.load %arg3[%c0_19, %c0_20, %c0_21] : memref<1x32x256xf32, #tpu.memory_space<vmem>>, vector<1x32x256xf32>
    %36 = vector.shape_cast %35 : vector<1x32x256xf32> to vector<32x256xf32>
    %cst_22 = arith.constant dense<0.000000e+00> : vector<16x256xf32>
    %37 = tpu.matmul %31, %36, %cst_22 {dimension_numbers = #tpu.dot_dimension_numbers<[1], [0], [0], [1], [0, 0, 1, 1], [], []>} : vector<16x32xf32>, vector<32x256xf32>, vector<16x256xf32> -> vector<16x256xf32>
    %38 = vector.extract_strided_slice %37 {offsets = [0, 0], sizes = [16, 128], strides = [1, 1]} : vector<16x256xf32> to vector<16x128xf32>
    %39 = vector.extract_strided_slice %37 {offsets = [0, 128], sizes = [16, 128], strides = [1, 1]} : vector<16x256xf32> to vector<16x128xf32>
    %cst_23 = arith.constant 0.000000e+00 : f32
    %40 = vector.broadcast %cst_23 : f32 to vector<16x128xf32>
    %41 = arith.subf %40, %38 : vector<16x128xf32>
    %cst_24 = arith.constant -2.000000e+00 : f32
    %42 = vector.broadcast %cst_24 : f32 to vector<16x128xf32>
    %43 = arith.mulf %42, %41 : vector<16x128xf32>
    %cst_25 = arith.constant 1.000000e+00 : f32
    %44 = vector.broadcast %cst_25 : f32 to vector<16x128xf32>
    %45 = arith.subf %44, %43 : vector<16x128xf32>
    %cst_26 = arith.constant -1.000000e+00 : f32
    %46 = vector.broadcast %cst_26 : f32 to vector<16x1xf32>
    %47 = arith.mulf %46, %34 : vector<16x1xf32>
    %48 = vector.broadcast %47 : vector<16x1xf32> to vector<16x128xf32>
    %49 = arith.subf %45, %48 : vector<16x128xf32>
    %cst_27 = arith.constant -1.000000e+00 : f32
    %50 = vector.broadcast %cst_27 : f32 to vector<1x128xf32>
    %51 = arith.mulf %50, %3 : vector<1x128xf32>
    %cst_28 = arith.constant 1.000000e+00 : f32
    %52 = vector.broadcast %cst_28 : f32 to vector<1x128xf32>
    %53 = arith.addf %52, %51 : vector<1x128xf32>
    %cst_29 = arith.constant -2.000000e+00 : f32
    %54 = vector.broadcast %cst_29 : f32 to vector<16x128xf32>
    %55 = arith.mulf %54, %41 : vector<16x128xf32>
    %cst_30 = arith.constant 1.000000e+00 : f32
    %56 = vector.broadcast %cst_30 : f32 to vector<16x128xf32>
    %57 = arith.subf %56, %55 : vector<16x128xf32>
    %cst_31 = arith.constant 1.000000e+00 : f32
    %58 = vector.broadcast %cst_31 : f32 to vector<1x128xf32>
    %59 = arith.mulf %58, %3 : vector<1x128xf32>
    %60 = vector.broadcast %59 : vector<1x128xf32> to vector<16x128xf32>
    %61 = vector.broadcast %34 : vector<16x1xf32> to vector<16x128xf32>
    %62 = arith.mulf %60, %61 : vector<16x128xf32>
    %63 = arith.addf %57, %62 : vector<16x128xf32>
    %cst_32 = arith.constant 1.000000e-15 : f32
    %64 = vector.broadcast %cst_32 : f32 to vector<16x128xf32>
    %65 = arith.maximumf %63, %64 : vector<16x128xf32>
    %cst_33 = arith.constant 1.000000e+00 : f32
    %66 = vector.broadcast %cst_33 : f32 to vector<16x128xf32>
    %67 = arith.divf %66, %65 : vector<16x128xf32>
    %68 = arith.mulf %49, %49 : vector<16x128xf32>
    %69 = vector.broadcast %3 : vector<1x128xf32> to vector<16x128xf32>
    %70 = arith.mulf %68, %69 : vector<16x128xf32>
    %cst_34 = arith.constant 2.000000e+00 : f32
    %71 = vector.broadcast %cst_34 : f32 to vector<16x128xf32>
    %72 = arith.mulf %71, %49 : vector<16x128xf32>
    %73 = vector.broadcast %53 : vector<1x128xf32> to vector<16x128xf32>
    %74 = arith.mulf %72, %73 : vector<16x128xf32>
    %75 = arith.mulf %74, %38 : vector<16x128xf32>
    %76 = arith.subf %70, %75 : vector<16x128xf32>
    %77 = arith.mulf %53, %53 : vector<1x128xf32>
    %78 = vector.broadcast %77 : vector<1x128xf32> to vector<16x128xf32>
    %79 = vector.broadcast %34 : vector<16x1xf32> to vector<16x128xf32>
    %80 = arith.mulf %78, %79 : vector<16x128xf32>
    %81 = arith.addf %76, %80 : vector<16x128xf32>
    %82 = arith.mulf %67, %67 : vector<16x128xf32>
    %83 = arith.mulf %81, %82 : vector<16x128xf32>
    %cst_35 = arith.constant 1.000000e-15 : f32
    %84 = vector.broadcast %cst_35 : f32 to vector<16x128xf32>
    %85 = arith.maximumf %83, %84 : vector<16x128xf32>
    %86 = vector.broadcast %53 : vector<1x128xf32> to vector<16x128xf32>
    %87 = arith.mulf %86, %39 : vector<16x128xf32>
    %88 = vector.broadcast %5 : vector<1x128xf32> to vector<16x128xf32>
    %89 = arith.mulf %49, %88 : vector<16x128xf32>
    %90 = arith.subf %87, %89 : vector<16x128xf32>
    %91 = arith.mulf %90, %67 : vector<16x128xf32>
    %cst_36 = arith.constant 2.000000e+00 : f32
    %92 = vector.broadcast %cst_36 : f32 to vector<16x128xf32>
    %93 = arith.mulf %92, %91 : vector<16x128xf32>
    %cst_37 = arith.constant -1.000000e+00 : f32
    %94 = vector.broadcast %cst_37 : f32 to vector<16x128xf32>
    %95 = arith.mulf %94, %85 : vector<16x128xf32>
    %cst_38 = arith.constant 1.000000e+00 : f32
    %96 = vector.broadcast %cst_38 : f32 to vector<16x128xf32>
    %97 = arith.addf %96, %95 : vector<16x128xf32>
    %98 = vector.broadcast %7 : vector<1x128xf32> to vector<16x128xf32>
    %99 = arith.mulf %97, %98 : vector<16x128xf32>
    %cst_39 = arith.constant 0.000000e+00 : f32
    %100 = vector.broadcast %cst_39 : f32 to vector<16x128xf32>
    %101 = arith.cmpf oge, %99, %100 : vector<16x128xf32>
    %cst_40 = arith.constant 1.000000e+00 : f32
    %cst_41 = arith.constant -1.000000e+00 : f32
    %102 = vector.broadcast %cst_40 : f32 to vector<16x128xf32>
    %103 = vector.broadcast %cst_41 : f32 to vector<16x128xf32>
    %104 = arith.select %101, %102, %103 : vector<16x128xi1>, vector<16x128xf32>
    %105 = math.absf %99 : vector<16x128xf32>
    %cst_42 = arith.constant 1.000000e-15 : f32
    %106 = vector.broadcast %cst_42 : f32 to vector<16x128xf32>
    %107 = arith.maximumf %105, %106 : vector<16x128xf32>
    %108 = arith.mulf %104, %107 : vector<16x128xf32>
    %109 = arith.divf %93, %108 : vector<16x128xf32>
    %cst_43 = arith.constant 1.000000e+00 : f32
    %110 = vector.broadcast %cst_43 : f32 to vector<16x128xf32>
    %111 = arith.mulf %109, %110 : vector<16x128xf32>
    %112 = math.absf %111 : vector<16x128xf32>
    %cst_44 = arith.constant 0.000000e+00 : f32
    %113 = vector.broadcast %cst_44 : f32 to vector<16x128xf32>
    %114 = arith.cmpf oge, %111, %113 : vector<16x128xf32>
    %cst_45 = arith.constant 1.000000e+00 : f32
    %cst_46 = arith.constant -1.000000e+00 : f32
    %115 = vector.broadcast %cst_45 : f32 to vector<16x128xf32>
    %116 = vector.broadcast %cst_46 : f32 to vector<16x128xf32>
    %117 = arith.select %114, %115, %116 : vector<16x128xi1>, vector<16x128xf32>
    %118 = arith.mulf %112, %112 : vector<16x128xf32>
    %cst_47 = arith.constant 1.000000e+00 : f32
    %119 = vector.broadcast %cst_47 : f32 to vector<16x128xf32>
    %120 = arith.addf %118, %119 : vector<16x128xf32>
    %121 = math.sqrt %120 : vector<16x128xf32>
    %122 = arith.addf %112, %121 : vector<16x128xf32>
    %123 = math.log %122 : vector<16x128xf32>
    %124 = arith.mulf %117, %123 : vector<16x128xf32>
    %cst_48 = arith.constant 1.000000e+00 : f32
    %125 = vector.broadcast %cst_48 : f32 to vector<16x128xf32>
    %126 = arith.mulf %124, %125 : vector<16x128xf32>
    %127 = vector.broadcast %7 : vector<1x128xf32> to vector<16x128xf32>
    %128 = arith.mulf %126, %127 : vector<16x128xf32>
    %c0_i32 = arith.constant 0 : i32
    %129 = arith.cmpi eq, %arg1, %c0_i32 : i32
    %130 = arith.extui %129 : i1 to i32
    %c0_i32_49 = arith.constant 0 : i32
    %131 = arith.cmpi ne, %130, %c0_i32_49 : i32
    scf.if %131 {
      %c0_52 = arith.constant 0 : index
      %c0_53 = arith.constant 0 : index
      %135 = vector.load %arg7[%c0_52, %c0_53] : memref<16x128xf32, #tpu.memory_space<vmem>>, vector<16x128xf32>
      tpu.vector_store %arg7[%c0_52, %c0_53], %128 {strides = array<i32>} : memref<16x128xf32, #tpu.memory_space<vmem>>, vector<16x128xf32>,
    } else {
    }
    %c0_i32_50 = arith.constant 0 : i32
    %132 = arith.cmpi sgt, %arg1, %c0_i32_50 : i32
    %133 = arith.extui %132 : i1 to i32
    %c0_i32_51 = arith.constant 0 : i32
    %134 = arith.cmpi ne, %133, %c0_i32_51 : i32
    scf.if %134 {
      %c0_52 = arith.constant 0 : index
      %c0_53 = arith.constant 0 : index
      %135 = vector.load %arg7[%c0_52, %c0_53] : memref<16x128xf32, #tpu.memory_space<vmem>>, vector<16x128xf32>
      %136 = arith.addf %135, %128 : vector<16x128xf32>
      %c0_54 = arith.constant 0 : index
      %c0_55 = arith.constant 0 : index
      %137 = vector.load %arg7[%c0_54, %c0_55] : memref<16x128xf32, #tpu.memory_space<vmem>>, vector<16x128xf32>
      tpu.vector_store %arg7[%c0_54, %c0_55], %136 {strides = array<i32>} : memref<16x128xf32, #tpu.memory_space<vmem>>, vector<16x128xf32>,
    } else {
    }
    return
  }
  func.func @transform_0(%arg0: i32, %arg1: i32) -> (i32, i32, i32) {
    %c0_i32 = arith.constant 0 : i32
    %c0_i32_0 = arith.constant 0 : i32
    return %arg1, %arg0, %c0_i32 : i32, i32, i32
  }
  func.func @transform_1(%arg0: i32, %arg1: i32) -> (i32, i32, i32) {
    %c0_i32 = arith.constant 0 : i32
    %c0_i32_0 = arith.constant 0 : i32
    %c0_i32_1 = arith.constant 0 : i32
    return %arg1, %c0_i32, %c0_i32_0 : i32, i32, i32
  }
  func.func @transform_2(%arg0: i32, %arg1: i32) -> (i32, i32, i32) {
    %c0_i32 = arith.constant 0 : i32
    %c0_i32_0 = arith.constant 0 : i32
    %c0_i32_1 = arith.constant 0 : i32
    return %arg1, %c0_i32, %c0_i32_0 : i32, i32, i32
  }
  func.func @transform_3(%arg0: i32, %arg1: i32) -> (i32, i32, i32) {
    %c0_i32 = arith.constant 0 : i32
    %c0_i32_0 = arith.constant 0 : i32
    %c0_i32_1 = arith.constant 0 : i32
    return %arg1, %c0_i32, %c0_i32_0 : i32, i32, i32
  }
  func.func @transform_4(%arg0: i32, %arg1: i32) -> (i32, i32, i32) {
    %c0_i32 = arith.constant 0 : i32
    %c0_i32_0 = arith.constant 0 : i32
    %c0_i32_1 = arith.constant 0 : i32
    return %arg1, %c0_i32, %c0_i32_0 : i32, i32, i32
  }
  func.func @transform_5(%arg0: i32, %arg1: i32) -> (i32, i32) {
    %c0_i32 = arith.constant 0 : i32
    %c0_i32_0 = arith.constant 0 : i32
    return %arg0, %c0_i32 : i32, i32
  }
}

</mosaic_0001>

<llo_original>
// kernel: tpu_custom_call.1
$region0: #{tpu_custom_call.1}
  #allocation0 [shape = 'u32[]', space=smem, size = 0x4, offset = 0x4, fixed_abs, tag = 'smem constant byte address 0x4 - core index']
  #allocation1 [shape = 'u32[144,128]{1,0:T(1,128)}', space=vmem, size = 0x12000, scoped, tag = 'internal scratch']
  %s0 = inlined_call_operand.hbm [shape: f32[1,16,32], index: 0, kind: input, shape index: {}]
  %s1 = inlined_call_operand.hbm [shape: f32[1,32,256], index: 1, kind: input, shape index: {}]
  %s2 = inlined_call_operand.vmem [shape: f32[1,1,128], index: 2, kind: input, shape index: {}]
  %s3 = inlined_call_operand.vmem [shape: f32[1,1,128], index: 3, kind: input, shape index: {}]
  %s4 = inlined_call_operand.vmem [shape: f32[1,1,128], index: 4, kind: input, shape index: {}]
  %s5 = inlined_call_operand.hbm [shape: f32[16,128], index: 5, kind: output, shape index: {}]
  %s6 = sld [smem:[#allocation0]]
  $region46: #{tpu_custom_call.1} parent=0
    _
  %s8 = ssub.s32 1, %s6
  %s9 = scalar_select 0, %s8, %s6
  $region1: #{tpu_custom_call.1} parent=0
    #allocation2 [shape = 'u8[8192]{0}', space=vmem, size = 0x2000, scoped, tag = 'input window, operand 0, single buffered']
    #allocation3 [shape = 's32[1]{0}', space=sflag, size = 0x4, scoped, tag = 'scoped memory for tpu_custom_call.1']
    #allocation4 [shape = 's32[1]{0}', space=sflag, size = 0x4, scoped, tag = 'scoped memory for tpu_custom_call.1']
    #allocation5 [shape = 'u8[32768]{0}', space=vmem, size = 0x8000, scoped, tag = 'input window, operand 1, single buffered']
    #allocation6 [shape = 's32[1]{0}', space=sflag, size = 0x4, scoped, tag = 'scoped memory for tpu_custom_call.1']
    #allocation7 [shape = 'u8[8192]{0}', space=vmem, size = 0x2000, scoped, tag = 'output window, operand 0, single buffered']
    %10 = vsyncpa [#allocation3], 0
    %11 = vsyncpa [#allocation6], 0
    %12 = vsyncpa [#allocation4], 0
    // Predicated region
    $region2: #{tpu_custom_call.1} parent=1 // pred_check
      _
    $region3: #{tpu_custom_call.1} parent=1 // pred_check_branch
      %14 = sbr.rel (0) target = $region5
    $region4: #{tpu_custom_call.1} parent=1 // pred_region
      %s16 = ssub.s32 256, 256
      %17 = vsyncadd [#allocation3], %s16
      %s18 = sshll.u32 [#allocation2], 4
      %s19 = int_to_ptr.vmem [resolvable:$true] %s18
      %24 = dma.hbm_to_vmem [thread:$0]  %s0, 256, %s19, [#allocation3], 128, 128, 8
    $region5: #{tpu_custom_call.1} parent=1 // pred_fallthru
      _
    // Predicated region
    $region6: #{tpu_custom_call.1} parent=1 // pred_check
      _
    $region7: #{tpu_custom_call.1} parent=1 // pred_check_branch
      %26 = sbr.rel (0) target = $region9
    $region8: #{tpu_custom_call.1} parent=1 // pred_region
      %s28 = ssub.s32 1024, 1024
      %29 = vsyncadd [#allocation6], %s28
      %s30 = sshll.u32 [#allocation5], 4
      %s31 = int_to_ptr.vmem [resolvable:$true] %s30
      %36 = dma.hbm_to_vmem [thread:$0]  %s1, 1024, %s31, [#allocation6], 256, 256, 16
    $region9: #{tpu_custom_call.1} parent=1 // pred_fallthru
      _
    // Predicated region
    $region10: #{tpu_custom_call.1} parent=1 // pred_check
      _
    $region11: #{tpu_custom_call.1} parent=1 // pred_check_branch
      %38 = sbr.rel (0) target = $region13
    $region12: #{tpu_custom_call.1} parent=1 // pred_region
      _
    $region13: #{tpu_custom_call.1} parent=1 // pred_fallthru
      _
    // Predicated region
    $region14: #{tpu_custom_call.1} parent=1 // pred_check
      _
    $region15: #{tpu_custom_call.1} parent=1 // pred_check_branch
      %40 = sbr.rel (0) target = $region17
    $region16: #{tpu_custom_call.1} parent=1 // pred_region
      _
    $region17: #{tpu_custom_call.1} parent=1 // pred_fallthru
      _
    // Predicated region
    $region18: #{tpu_custom_call.1} parent=1 // pred_check
      _
    $region19: #{tpu_custom_call.1} parent=1 // pred_check_branch
      %42 = sbr.rel (0) target = $region21
    $region20: #{tpu_custom_call.1} parent=1 // pred_region
      _
    $region21: #{tpu_custom_call.1} parent=1 // pred_fallthru
      _
    // Predicated region
    $region22: #{tpu_custom_call.1} parent=1 // pred_check
      _
    $region23: #{tpu_custom_call.1} parent=1 // pred_check_branch
      %44 = sbr.rel (0) target = $region25
    $region24: #{tpu_custom_call.1} parent=1 // pred_region
      %45 = dma.done [#allocation3], 256
    $region25: #{tpu_custom_call.1} parent=1 // pred_fallthru
      _
    // Predicated region
    $region26: #{tpu_custom_call.1} parent=1 // pred_check
      _
    $region27: #{tpu_custom_call.1} parent=1 // pred_check_branch
      %47 = sbr.rel (0) target = $region29
    $region28: #{tpu_custom_call.1} parent=1 // pred_region
      %48 = dma.done [#allocation6], 1024
    $region29: #{tpu_custom_call.1} parent=1 // pred_fallthru
      _
    %v49 = vld [vmem:[#allocation2] sm:$0xff]
    %v50 = vld [vmem:[#allocation2 + $0x8] sm:$0xff]
    %v51 = vld [vmem:[%s2] sm:$0x1]
    %v52 = vld [vmem:[%s3] sm:$0x1]
    %v53 = vld [vmem:[%s4] sm:$0x1]
    %v54 = vmul.f32 %v49, %v49
    %v55 = vmul.f32 %v50, %v50
    %vm56 = vcmask 261120
    %v57 = vsel %vm56, %v54, 0.0
    %58 = vadd.xlane.f32.xlu0 %v57
    %v59 = vpop.xlane.xlu0 %58
    %v60 = vsel %vm56, %v55, 0.0
    %61 = vadd.xlane.f32.xlu0 %v60
    %v62 = vpop.xlane.xlu0 %61
    %v63 = vrsqrt.pop %v59
    %v64 = vmul.f32 %v59, %v63
    %vm65 = vcmp.eq.f32.partialorder %v59, inf
    %v66 = vsel %vm65, %v59, %v64
    %vm67 = vcmp.eq.f32.partialorder %v59, 0.0
    %v68 = vand.u32 %v59, 2147483648
    %v69 = vsel %vm67, %v68, %v66
    %v70 = vrsqrt.pop %v62
    %v71 = vmul.f32 %v62, %v70
    %vm72 = vcmp.eq.f32.partialorder %v62, inf
    %v73 = vsel %vm72, %v62, %v71
    %vm74 = vcmp.eq.f32.partialorder %v62, 0.0
    %v75 = vand.u32 %v62, 2147483648
    %v76 = vsel %vm74, %v75, %v73
    %v77 = vmax.f32 %v69, 1e-15
    %v78 = vmax.f32 %v76, 1e-15
    %v79 = vtanh.pop %v77
    %v80 = vtanh.pop %v78
    %v81 = vrcp.pop %v77
    %v82 = vmul.f32 %v79, %v81
    %v83 = vrcp.pop %v78
    %v84 = vmul.f32 %v80, %v83
    %v85 = vmul.f32 %v49, %v82
    %v86 = vmul.f32 %v50, %v84
    %v87 = vmax.f32 %v79, 1e-15
    %v88 = vmax.f32 %v80, 1e-15
    %v89 = vrcp.pop %v87
    %v90 = vmul.f32 0.996, %v89
    %v91 = vrcp.pop %v88
    %v92 = vmul.f32 0.996, %v91
    %v93 = vmin.f32 %v90, 1.0
    %v94 = vmin.f32 %v92, 1.0
    %v95 = vmul.f32 %v85, %v93
    %v96 = vmul.f32 %v86, %v94
    %v97 = vmin.f32 %v87, 0.996
    %v98 = vmin.f32 %v88, 0.996
    %v99 = vmul.f32 %v97, %v97
    %v100 = vmul.f32 %v98, %v98
    %v101 = vld [vmem:[#allocation5] sm:$0xff]
    %v102 = vld [vmem:[#allocation5 + $0x8] sm:$0xff]
    %v103 = vld [vmem:[#allocation5 + $0x10] sm:$0xff]
    %v104 = vld [vmem:[#allocation5 + $0x18] sm:$0xff]
    %v105 = vld [vmem:[#allocation5 + $0x20] sm:$0xff]
    %v106 = vld [vmem:[#allocation5 + $0x28] sm:$0xff]
    %v107 = vld [vmem:[#allocation5 + $0x30] sm:$0xff]
    %v108 = vld [vmem:[#allocation5 + $0x38] sm:$0xff]
    %v110 = vsel %vm56, %v95, 0
    %v113 = vsel %vm56, %v96, 0
    %115 = vmatprep.subr.mxu0 0.0
    %116 = vmatpush1.msra.mxu0 0.0
    %117 = vmatprep.subr.mxu0 0.0
    %118 = vmatpush1.msra.mxu0 0.0
    %119 = vmatprep.subr.mxu0 0.0
    %120 = vmatpush1.msra.mxu0 0.0
    %121 = vmatprep.subr.mxu0 0.0
    %122 = vmatpush1.msra.mxu0 0.0
    %123 = vmatprep.subr.mxu0 0.0
    %124 = vmatpush1.msra.mxu0 0.0
    %125 = vmatprep.subr.mxu0 0.0
    %126 = vmatpush1.msra.mxu0 0.0
    %127 = vmatprep.subr.mxu0 0.0
    %128 = vmatpush1.msra.mxu0 0.0
    %129 = vmatprep.subr.mxu0 0.0
    %130 = vmatpush1.msra.mxu0 0.0
    %131 = vmatprep.subr.mxu0 0.0
    %132 = vmatpush1.msra.mxu0 0.0
    %133 = vmatprep.subr.mxu0 0.0
    %134 = vmatpush1.msra.mxu0 0.0
    %135 = vmatprep.subr.mxu0 0.0
    %136 = vmatpush1.msra.mxu0 0.0
    %137 = vmatprep.subr.mxu0 0.0
    %138 = vmatpush1.msra.mxu0 0.0
    %139 = vmatprep.subr.mxu0 %v108
    %140 = vmatpush1.msra.mxu0 %v107
    %141 = vmatprep.subr.mxu0 %v106
    %142 = vmatpush1.msra.mxu0 %v105
    %143 = vmatprep.subr.mxu0 %v104
    %144 = vmatpush1.msra.mxu0 %v103
    %145 = vmatprep.subr.mxu0 %v102
    %146 = vmatpush1.msra.mxu0 %v101
    %147 = vmatprep.subr.mxu0 0.0
    %148 = vmatpush2.msra.mxu0 0.0
    %149 = vmatprep.subr.mxu0 0.0
    %150 = vmatpush2.msra.mxu0 0.0
    %151 = vmatprep.subr.mxu0 0.0
    %152 = vmatpush2.msra.mxu0 0.0
    %153 = vmatprep.subr.mxu0 0.0
    %154 = vmatpush2.msra.mxu0 0.0
    %155 = vmatprep.subr.mxu0 0.0
    %156 = vmatpush2.msra.mxu0 0.0
    %157 = vmatprep.subr.mxu0 0.0
    %158 = vmatpush2.msra.mxu0 0.0
    %159 = vmatprep.subr.mxu0 0.0
    %160 = vmatpush2.msra.mxu0 0.0
    %161 = vmatprep.subr.mxu0 0.0
    %162 = vmatpush2.msra.mxu0 0.0
    %163 = vmatprep.subr.mxu0 0.0
    %164 = vmatpush2.msra.mxu0 0.0
    %165 = vmatprep.subr.mxu0 0.0
    %166 = vmatpush2.msra.mxu0 0.0
    %167 = vmatprep.subr.mxu0 0.0
    %168 = vmatpush2.msra.mxu0 0.0
    %169 = vmatprep.subr.mxu0 0.0
    %170 = vmatpush2.msra.mxu0 0.0
    %171 = vmatprep.subr.mxu0 0.0
    %172 = vmatpush2.msra.mxu0 0.0
    %173 = vmatprep.subr.mxu0 0.0
    %174 = vmatpush2.msra.mxu0 0.0
    %175 = vmatprep.subr.mxu0 0.0
    %176 = vmatpush2.msra.mxu0 0.0
    %177 = vmatprep.subr.mxu0 0.0
    %178 = vmatpush2.msra.mxu0 0.0
    %179 = vmatprep.mubr.f32.mxu0 0.0
    %180 = vmatmul.mubr.f32.gmra.mxu0 %v110
    %v181 = vpop.f32.mrf.mxu0
    %v182 = vadd.f32 0.0, %v181
    %v183 = vpop.f32.mrf.mxu0
    %v184 = vadd.f32 0.0, %v183
    %185 = vmatprep.mubr.f32.mxu0 0.0
    %186 = vmatmul.mubr.f32.gmra.mxu0 %v113
    %v187 = vpop.f32.mrf.mxu0
    %v188 = vadd.f32 0.0, %v187
    %v189 = vpop.f32.mrf.mxu0
    %v190 = vadd.f32 0.0, %v189
    %191 = vdwg.mxu0
    %v192 = vsub.f32 0.0, %v182
    %v193 = vsub.f32 0.0, %v188
    %v194 = vmul.f32 %v192, -2.0
    %v195 = vmul.f32 %v193, -2.0
    %v196 = vsub.f32 1.0, %v194
    %v197 = vsub.f32 1.0, %v195
    %v198 = vmul.f32 %v99, -1.0
    %v199 = vmul.f32 %v100, -1.0
    %v200 = vsub.f32 %v196, %v198
    %v201 = vsub.f32 %v197, %v199
    %v202 = vmul.f32 %v51, -1.0
    %v203 = vadd.f32 %v202, 1.0
    %v205 = vlaneseq
    %v206 = vshrl.u32 %v205, 7
    %v207 = vsub.s32 0, %v206
    %v208 = vrot.slane %v51, %v207
    %v210 = vmul.f32 %v208, %v99
    %v211 = vmul.f32 %v208, %v100
    %v212 = vadd.f32 %v196, %v210
    %v213 = vadd.f32 %v197, %v211
    %v214 = vmax.f32 %v212, 1e-15
    %v215 = vmax.f32 %v213, 1e-15
    %v216 = vrcp.pop %v214
    %v217 = vmul.f32 1.0, %v216
    %v218 = vrcp.pop %v215
    %v219 = vmul.f32 1.0, %v218
    %v220 = vmul.f32 %v200, %v200
    %v221 = vmul.f32 %v201, %v201
    %v222 = vmul.f32 %v220, %v208
    %v223 = vmul.f32 %v221, %v208
    %v224 = vmul.f32 %v200, 2.0
    %v225 = vmul.f32 %v201, 2.0
    %v227 = vlaneseq
    %v228 = vshrl.u32 %v227, 7
    %v229 = vsub.s32 0, %v228
    %v230 = vrot.slane %v203, %v229
    %v232 = vmul.f32 %v224, %v230
    %v233 = vmul.f32 %v225, %v230
    %v234 = vmul.f32 %v232, %v182
    %v235 = vmul.f32 %v233, %v188
    %v236 = vsub.f32 %v222, %v234
    %v237 = vsub.f32 %v223, %v235
    %v238 = vmul.f32 %v203, %v203
    %v240 = vlaneseq
    %v241 = vshrl.u32 %v240, 7
    %v242 = vsub.s32 0, %v241
    %v243 = vrot.slane %v238, %v242
    %v245 = vmul.f32 %v243, %v99
    %v246 = vmul.f32 %v243, %v100
    %v247 = vadd.f32 %v236, %v245
    %v248 = vadd.f32 %v237, %v246
    %v249 = vmul.f32 %v217, %v217
    %v250 = vmul.f32 %v219, %v219
    %v251 = vmul.f32 %v247, %v249
    %v252 = vmul.f32 %v248, %v250
    %v253 = vmax.f32 %v251, 1e-15
    %v254 = vmax.f32 %v252, 1e-15
    %v255 = vmul.f32 %v230, %v184
    %v256 = vmul.f32 %v230, %v190
    %v258 = vlaneseq
    %v259 = vshrl.u32 %v258, 7
    %v260 = vsub.s32 0, %v259
    %v261 = vrot.slane %v52, %v260
    %v263 = vmul.f32 %v200, %v261
    %v264 = vmul.f32 %v201, %v261
    %v265 = vsub.f32 %v255, %v263
    %v266 = vsub.f32 %v256, %v264
    %v267 = vmul.f32 %v265, %v217
    %v268 = vmul.f32 %v266, %v219
    %v269 = vmul.f32 %v267, 2.0
    %v270 = vmul.f32 %v268, 2.0
    %v271 = vmul.f32 %v253, -1.0
    %v272 = vmul.f32 %v254, -1.0
    %v273 = vadd.f32 %v271, 1.0
    %v274 = vadd.f32 %v272, 1.0
    %v276 = vlaneseq
    %v277 = vshrl.u32 %v276, 7
    %v278 = vsub.s32 0, %v277
    %v279 = vrot.slane %v53, %v278
    %v281 = vmul.f32 %v273, %v279
    %v282 = vmul.f32 %v274, %v279
    %vm283 = vcmp.ge.f32.partialorder %v281, 0.0
    %vm284 = vcmp.ge.f32.partialorder %v282, 0.0
    %v285 = vsel %vm283, 1.0, -1.0
    %v286 = vsel %vm284, 1.0, -1.0
    %v287 = vand.u32 2147483647, %v281
    %v288 = vand.u32 2147483647, %v282
    %v289 = vmax.f32 %v287, 1e-15
    %v290 = vmax.f32 %v288, 1e-15
    %v291 = vmul.f32 %v285, %v289
    %v292 = vmul.f32 %v286, %v290
    %v293 = vrcp.pop %v291
    %v294 = vmul.f32 %v269, %v293
    %v295 = vrcp.pop %v292
    %v296 = vmul.f32 %v270, %v295
    %v297 = vand.u32 2147483647, %v294
    %v298 = vand.u32 2147483647, %v296
    %vm299 = vcmp.ge.f32.partialorder %v294, 0.0
    %vm300 = vcmp.ge.f32.partialorder %v296, 0.0
    %v301 = vsel %vm299, 1.0, -1.0
    %v302 = vsel %vm300, 1.0, -1.0
    %v303 = vmul.f32 %v297, %v297
    %v304 = vmul.f32 %v298, %v298
    %v305 = vadd.f32 %v303, 1.0
    %v306 = vadd.f32 %v304, 1.0
    %v307 = vrsqrt.pop %v305
    %v308 = vmul.f32 %v305, %v307
    %vm309 = vcmp.eq.f32.partialorder %v305, inf
    %v310 = vsel %vm309, %v305, %v308
    %vm311 = vcmp.eq.f32.partialorder %v305, 0.0
    %v312 = vand.u32 %v305, 2147483648
    %v313 = vsel %vm311, %v312, %v310
    %v314 = vrsqrt.pop %v306
    %v315 = vmul.f32 %v306, %v314
    %vm316 = vcmp.eq.f32.partialorder %v306, inf
    %v317 = vsel %vm316, %v306, %v315
    %vm318 = vcmp.eq.f32.partialorder %v306, 0.0
    %v319 = vand.u32 %v306, 2147483648
    %v320 = vsel %vm318, %v319, %v317
    %v321 = vadd.f32 %v297, %v313
    %v322 = vadd.f32 %v298, %v320
    %v323 = vlog2.pop %v321
    %v324 = vmul.f32 %v323, 0.6931472
    %v325 = vlog2.pop %v322
    %v326 = vmul.f32 %v325, 0.6931472
    %v327 = vmul.f32 %v301, %v324
    %v328 = vmul.f32 %v302, %v326
    %v329 = vmul.f32 %v327, %v279
    %v330 = vmul.f32 %v328, %v279
    %p331 = scmp.eq.s32.totalorder 0, 0
    // Predicated region
    $region30: #{tpu_custom_call.1} parent=1 // pred_check
      %p332 = pneg %p331
    $region31: #{tpu_custom_call.1} parent=1 // pred_check_branch
      %334 = sbr.rel (%p332) target = $region33
    $region32: #{tpu_custom_call.1} parent=1 // pred_region
      %335 = vst [vmem:[#allocation7] sm:$0xff] %v329
      %336 = vst [vmem:[#allocation7 + $0x8] sm:$0xff] %v330
    $region33: #{tpu_custom_call.1} parent=1 // pred_fallthru
      _
    %p337 = scmp.gt.s32.totalorder 0, 0
    // Predicated region
    $region34: #{tpu_custom_call.1} parent=1 // pred_check
      %p338 = pneg %p337
    $region35: #{tpu_custom_call.1} parent=1 // pred_check_branch
      %340 = sbr.rel (%p338) target = $region37
    $region36: #{tpu_custom_call.1} parent=1 // pred_region
      %v341 = vld [vmem:[#allocation7] sm:$0xff]
      %v342 = vld [vmem:[#allocation7 + $0x8] sm:$0xff]
      %v343 = vadd.f32 %v341, %v329
      %v344 = vadd.f32 %v342, %v330
      %345 = vst [vmem:[#allocation7] sm:$0xff] %v343
      %346 = vst [vmem:[#allocation7 + $0x8] sm:$0xff] %v344
    $region37: #{tpu_custom_call.1} parent=1 // pred_fallthru
      _
    // Predicated region
    $region38: #{tpu_custom_call.1} parent=1 // pred_check
      _
    $region39: #{tpu_custom_call.1} parent=1 // pred_check_branch
      %348 = sbr.rel (0) target = $region41
    $region40: #{tpu_custom_call.1} parent=1 // pred_region
      %s350 = ssub.s32 256, 256
      %351 = vsyncadd [#allocation4], %s350
      %s352 = sshll.u32 [#allocation7], 4
      %s353 = int_to_ptr.vmem [resolvable:$true] %s352
      %358 = dma.vmem_to_hbm [thread:$0]  %s353, 256, %s5, [#allocation4], 128, 128, 8
    $region41: #{tpu_custom_call.1} parent=1 // pred_fallthru
      _
    // Predicated region
    $region42: #{tpu_custom_call.1} parent=1 // pred_check
      _
    $region43: #{tpu_custom_call.1} parent=1 // pred_check_branch
      %360 = sbr.rel (0) target = $region45
    $region44: #{tpu_custom_call.1} parent=1 // pred_region
      %361 = dma.done [#allocation4], 256
    $region45: #{tpu_custom_call.1} parent=1 // pred_fallthru
      _
    %362 = vsyncpa [#allocation3], 1
    %363 = vsyncpa [#allocation6], 1
    %364 = vsyncpa [#allocation4], 1

</llo_original>
